<compile_context>
chip_gen: v5e
topology: v5e:2x2
jax: 0.10.0
libtpu: 0.0.40
codegen_flags: <defaults>
</compile_context>

<pallas_src>
import functools

import jax
import jax.numpy as jnp
from jax.experimental import pallas as pl
from jax.experimental.pallas import tpu as pltpu

BN_EPS = 1e-5
_VMEM_LIMIT_BYTES = 32 * 1024 * 1024   # safe scoped-VMEM limit on v5e/v6e/v7x


def _rtic_stats_kernel(
    x_img_ref, x_txt_ref,            # (TILE_B, C_img), (TILE_B, C_txt)
    sh_img_ref, sh_txt_ref,          # (1, C_img), (1, C_txt) per-channel shift (x[0])
    s_img_ref, q_img_ref,            # (1, 1, C_img) per-tile shifted sum / sum-of-squares
    s_txt_ref, q_txt_ref,            # (1, 1, C_txt)
    *, batch, tile_b, mask_last_tile,
):
    """Pass 1: per-tile partial BN statistics (parallel over batch tiles)."""
    if mask_last_tile:
        rows = (pl.program_id(0) * tile_b
                + jax.lax.broadcasted_iota(jnp.int32, (tile_b, 1), 0))
        valid = rows < batch

    def partial_stats(x_ref, sh_ref, s_ref, q_ref):
        x = x_ref[...]
        if x.dtype != jnp.float32:
            x = x.astype(jnp.float32)
        d = x - sh_ref[...]                       # shifted sums: stable variance
        if mask_last_tile:
            d = jnp.where(valid, d, 0.0)          # overhang rows contribute nothing
        s_ref[0] = jnp.sum(d, axis=0, keepdims=True)
        q_ref[0] = jnp.sum(d * d, axis=0, keepdims=True)

    partial_stats(x_img_ref, sh_img_ref, s_img_ref, q_img_ref)
    partial_stats(x_txt_ref, sh_txt_ref, s_txt_ref, q_txt_ref)


def _rtic_apply_kernel(
    x_img_ref, x_txt_ref,            # (TILE_B, C_img), (TILE_B, C_txt)
    a_img_ref, c_img_ref,            # (1, C_img) folded BN scale / shift (precomputed)
    a_txt_ref, c_txt_ref,            # (1, C_txt)
    w_ref, bias_ref,                 # (C_in, C_out) matmul dtype, (1, C_out) f32
    o_ref,                           # (TILE_B, C_out)
    y_ref,                           # VMEM scratch (TILE_B, C_in) matmul dtype
    *, img_channels, batch, tile_b, mask_last_tile,
):
    """Pass 2: y = ReLU(x*a + c) lane-concat; out = y @ W + b (parallel over tiles)."""
    if mask_last_tile:
        rows = (pl.program_id(0) * tile_b
                + jax.lax.broadcasted_iota(jnp.int32, (tile_b, 1), 0))
        valid = rows < batch

    def bn_relu(x_ref, a_ref, c_ref):
        x = x_ref[...]
        if x.dtype != jnp.float32:
            x = x.astype(jnp.float32)
        y = jnp.maximum(x * a_ref[...] + c_ref[...], 0.0)
        if mask_last_tile:
            # Keep garbage from the overhanging last input block out of the MXU;
            # the corresponding output rows are clipped on writeback anyway.
            y = jnp.where(valid, y, 0.0)
        return y

    # VMEM lane-concat: both streams land in adjacent lane ranges of one buffer,
    # replacing the HBM-level torch.cat and allowing a single MXU matmul.
    y_ref[:, :img_channels] = bn_relu(x_img_ref, a_img_ref, c_img_ref).astype(y_ref.dtype)
    y_ref[:, img_channels:] = bn_relu(x_txt_ref, a_txt_ref, c_txt_ref).astype(y_ref.dtype)

    acc = jnp.dot(y_ref[...], w_ref[...], preferred_element_type=jnp.float32)
    o_ref[...] = (acc + bias_ref[...]).astype(o_ref.dtype)


def _auto_tile_b(batch):
    # ~1 KiB of VMEM per row (double-buffered f32 img+txt inputs, f32 output,
    # bf16 activation scratch, f32 accumulator) -> 8192 rows is ~10 MiB, well
    # inside the 32 MiB scoped limit set below on every generation (v7x: 64 MiB
    # physical; v5e: 16 MiB default scoped, raised via vmem_limit_bytes).
    if batch <= 8192:
        return batch            # single resident tile (full-extent block)
    return 8192                 # stream large batches in 8-row-aligned tiles


def rtic_fusion(x_img, x_text, gamma, beta, w, b, *,
                tile_b=None, matmul_dtype=jnp.bfloat16, out_dtype=jnp.float32):
    """Fused cat + BatchNorm1d(train) + ReLU + Linear.

    x_img : (B, C_img)      x_text : (B, C_text)
    gamma, beta : (C_in,) or (1, C_in)   BN affine over C_in = C_img + C_text
    w : (C_in, C_out)  Linear weight (already transposed vs. torch's (out, in))
    b : (C_out,) or (1, C_out)
    """
    B, c_img = x_img.shape
    B2, c_txt = x_text.shape
    assert B == B2 and B >= 1
    c_in = c_img + c_txt
    c_out = w.shape[1]
    assert w.shape == (c_in, c_out)

    gamma = gamma.reshape(1, c_in).astype(jnp.float32)
    beta = beta.reshape(1, c_in).astype(jnp.float32)
    bias = b.reshape(1, c_out).astype(jnp.float32)

    if tile_b is None:
        tile_b = _auto_tile_b(B)
    tile_b = min(tile_b, B)
    if tile_b != B:
        assert tile_b % 8 == 0, "batch tile must be a sublane (8) multiple"
    num_tiles = pl.cdiv(B, tile_b)
    mask_last_tile = (B % tile_b) != 0

    x_map = lambda t: (t, 0)     # activation / output tiles follow the batch-tile axis
    p_map = lambda t: (0, 0)     # parameters stay resident (fetched once)

    compiler_params = pltpu.CompilerParams(
        # Single batch-tile axis, no cross-iteration state -> megacore-shardable
        # (on v7x the tiles split across both TensorCores).
        dimension_semantics=("parallel",),
        vmem_limit_bytes=_VMEM_LIMIT_BYTES)

    # Per-channel shift (the first sample) for numerically stable shifted sums:
    # var = E[(x - s)^2] - (E[x] - s)^2 avoids E[x^2]-E[x]^2 cancellation.
    shift_img = x_img[:1].astype(jnp.float32)
    shift_txt = x_text[:1].astype(jnp.float32)

    # ---- Pass 1: per-tile partial BN statistics. ----------------------------------
    stats_spec = lambda c: pl.BlockSpec((1, 1, c), lambda t: (t, 0, 0))
    s_img, q_img, s_txt, q_txt = pl.pallas_call(
        functools.partial(_rtic_stats_kernel, batch=B, tile_b=tile_b,
                          mask_last_tile=mask_last_tile),
        out_shape=(jax.ShapeDtypeStruct((num_tiles, 1, c_img), jnp.float32),
                   jax.ShapeDtypeStruct((num_tiles, 1, c_img), jnp.float32),
                   jax.ShapeDtypeStruct((num_tiles, 1, c_txt), jnp.float32),
                   jax.ShapeDtypeStruct((num_tiles, 1, c_txt), jnp.float32)),
        grid=(num_tiles,),
        in_specs=[
            pl.BlockSpec((tile_b, c_img), x_map),
            pl.BlockSpec((tile_b, c_txt), x_map),
            pl.BlockSpec((1, c_img), p_map),
            pl.BlockSpec((1, c_txt), p_map),
        ],
        out_specs=(stats_spec(c_img), stats_spec(c_img),
                   stats_spec(c_txt), stats_spec(c_txt)),
        compiler_params=compiler_params,
    )(x_img, x_text, shift_img, shift_txt)

    # ---- Tiny JAX-level reduce + BN fold (hoisted out of the per-tile kernel). ----
    inv_n = jnp.float32(1.0 / B)
    shift = jnp.concatenate([shift_img, shift_txt], axis=1)             # (1, C_in)
    d_sum = jnp.concatenate([s_img.sum(0), s_txt.sum(0)], axis=1)       # (1, C_in)
    d_sq = jnp.concatenate([q_img.sum(0), q_txt.sum(0)], axis=1)        # (1, C_in)
    d_mean = d_sum * inv_n
    mean = shift + d_mean
    var = jnp.maximum(d_sq * inv_n - d_mean * d_mean, 0.0)   # biased var (BN training)
    bn_scale = gamma * jax.lax.rsqrt(var + BN_EPS)            # y = x * a + c
    bn_shift = beta - mean * bn_scale

    # ---- Pass 2: BN + ReLU + Linear over the same batch tiles. --------------------
    out = pl.pallas_call(
        functools.partial(_rtic_apply_kernel, img_channels=c_img, batch=B,
                          tile_b=tile_b, mask_last_tile=mask_last_tile),
        out_shape=jax.ShapeDtypeStruct((B, c_out), out_dtype),
        grid=(num_tiles,),
        in_specs=[
            pl.BlockSpec((tile_b, c_img), x_map),
            pl.BlockSpec((tile_b, c_txt), x_map),
            pl.BlockSpec((1, c_img), p_map),
            pl.BlockSpec((1, c_img), p_map),
            pl.BlockSpec((1, c_txt), p_map),
            pl.BlockSpec((1, c_txt), p_map),
            pl.BlockSpec((c_in, c_out), p_map),
            pl.BlockSpec((1, c_out), p_map),
        ],
        out_specs=pl.BlockSpec((tile_b, c_out), x_map),
        scratch_shapes=[pltpu.VMEM((tile_b, c_in), matmul_dtype)],
        compiler_params=compiler_params,
    )(x_img, x_text,
      bn_scale[:, :c_img], bn_shift[:, :c_img],
      bn_scale[:, c_img:], bn_shift[:, c_img:],
      w.astype(matmul_dtype), bias)

    return out


def reference(x_img, x_text, gamma, beta, w, b):
    """Pure-JAX f32 reference matching the PyTorch forward (training-mode BN)."""
    x = jnp.concatenate([x_img, x_text], axis=1)
    mean = jnp.mean(x, axis=0, keepdims=True)
    var = jnp.mean((x - mean) ** 2, axis=0, keepdims=True)
    y = (x - mean) * jax.lax.rsqrt(var + BN_EPS) * gamma.reshape(1, -1) + beta.reshape(1, -1)
    y = jnp.maximum(y, 0.0)
    return y @ w + b.reshape(1, -1)


if __name__ == "__main__":
    # Module config consistent with RticFusionModule(in_c_img, in_c_text, "ReLU").
    in_c_img, in_c_text = 32, 16
    C_in = in_c_img + in_c_text
    C_out = in_c_img

    key = jax.random.PRNGKey(0)
    k_img, k_text, k_g, k_b, k_w, k_bias = jax.random.split(key, 6)

    B = 32
    x_img = jax.random.normal(k_img, (B, in_c_img), dtype=jnp.float32)
    x_text = jax.random.normal(k_text, (B, in_c_text), dtype=jnp.float32)

    # Deterministic synthetic parameters (BN gamma~1/beta~0 slightly perturbed;
    # Linear uniform(-1/sqrt(C_in), 1/sqrt(C_in))).
    gamma = jnp.ones((1, C_in), jnp.float32) + 0.01 * jax.random.normal(k_g, (1, C_in))
    beta = 0.01 * jax.random.normal(k_b, (1, C_in), dtype=jnp.float32)
    bound = 1.0 / (C_in ** 0.5)
    w = jax.random.uniform(k_w, (C_in, C_out), jnp.float32, -bound, bound)
    b = jax.random.uniform(k_bias, (1, C_out), jnp.float32, -bound, bound)

    ref = reference(x_img, x_text, gamma, beta, w, b)

    # (1) Multi-tile grid (4 batch tiles of 8 rows) with exact f32 MXU inputs:
    #     exercises cross-tile stat combination; must match tightly.
    out_tiled = jax.block_until_ready(
        rtic_fusion(x_img, x_text, gamma, beta, w, b,
                    tile_b=8, matmul_dtype=jnp.float32))
    assert out_tiled.shape == (B, C_out)
    assert jnp.allclose(out_tiled, ref, atol=1e-4, rtol=1e-4), "tiled f32 mismatch"

    # (2) Default config: single resident batch tile + bf16 MXU inputs (f32 acc).
    out_default = jax.block_until_ready(rtic_fusion(x_img, x_text, gamma, beta, w, b))
    assert out_default.shape == (B, C_out)
    assert jnp.allclose(out_default, ref, atol=2e-2, rtol=2e-2), "bf16 mismatch"

    # (3) Ragged batch (B not a multiple of tile_b): exercises the stats/apply row
    #     masks and the clipped writeback of the overhanging output block.
    Br = 20
    ref_r = reference(x_img[:Br], x_text[:Br], gamma, beta, w, b)
    out_ragged = jax.block_until_ready(
        rtic_fusion(x_img[:Br], x_text[:Br], gamma, beta, w, b,
                    tile_b=8, matmul_dtype=jnp.float32))
    assert out_ragged.shape == (Br, C_out)
    assert jnp.allclose(out_ragged, ref_r, atol=1e-4, rtol=1e-4), "ragged mismatch"

    # (4) bf16 output writeback path.
    out_bf16 = jax.block_until_ready(
        rtic_fusion(x_img, x_text, gamma, beta, w, b,
                    matmul_dtype=jnp.float32, out_dtype=jnp.bfloat16))
    assert out_bf16.dtype == jnp.bfloat16
    assert jnp.allclose(out_bf16.astype(jnp.float32), ref,
                        atol=2e-2, rtol=2e-2), "bf16-out mismatch"

    print("KERNEL_OK")
</pallas_src>

<mosaic_0001>
module attributes {stable_mosaic.version = 11 : i64} {
  func.func @_rtic_stats_kernel(%arg0: i32, %arg1: memref<8x32xf32, #tpu.memory_space<vmem>>, %arg2: memref<8x16xf32, #tpu.memory_space<vmem>>, %arg3: memref<1x32xf32, #tpu.memory_space<vmem>>, %arg4: memref<1x16xf32, #tpu.memory_space<vmem>>, %arg5: memref<1x1x32xf32, #tpu.memory_space<vmem>>, %arg6: memref<1x1x32xf32, #tpu.memory_space<vmem>>, %arg7: memref<1x1x16xf32, #tpu.memory_space<vmem>>, %arg8: memref<1x1x16xf32, #tpu.memory_space<vmem>>) attributes {dimension_semantics = [#tpu.dimension_semantics<parallel>], iteration_bounds = array<i64: 4>, scalar_prefetch = 0 : i64, scratch_operands = 0 : i64, tpu.core_type = #tpu.core_type<tc>, window_params = [{transform_indices = @transform_0, window_bounds = array<i64: 8, 32>}, {transform_indices = @transform_1, window_bounds = array<i64: 8, 16>}, {pipeline_mode = #tpu.pipeline_mode<synchronous>, transform_indices = @transform_2, window_bounds = array<i64: 1, 32>}, {pipeline_mode = #tpu.pipeline_mode<synchronous>, transform_indices = @transform_3, window_bounds = array<i64: 1, 16>}, {transform_indices = @transform_4, window_bounds = array<i64: 1, 1, 32>}, {transform_indices = @transform_5, window_bounds = array<i64: 1, 1, 32>}, {transform_indices = @transform_6, window_bounds = array<i64: 1, 1, 16>}, {transform_indices = @transform_7, window_bounds = array<i64: 1, 1, 16>}]} {
    %c0 = arith.constant 0 : index
    %c0_0 = arith.constant 0 : index
    %0 = vector.load %arg1[%c0, %c0_0] : memref<8x32xf32, #tpu.memory_space<vmem>>, vector<8x32xf32>
    %c0_1 = arith.constant 0 : index
    %c0_2 = arith.constant 0 : index
    %1 = vector.load %arg3[%c0_1, %c0_2] : memref<1x32xf32, #tpu.memory_space<vmem>>, vector<1x32xf32>
    %2 = vector.broadcast %1 : vector<1x32xf32> to vector<8x32xf32>
    %3 = arith.subf %0, %2 : vector<8x32xf32>
    %cst = arith.constant dense<0.000000e+00> : vector<32xf32>
    %4 = vector.multi_reduction <add>, %3, %cst [0] : vector<8x32xf32> to vector<32xf32>
    %5 = vector.shape_cast %4 : vector<32xf32> to vector<1x32xf32>
    %c0_3 = arith.constant 0 : index
    %c0_4 = arith.constant 0 : index
    %c0_5 = arith.constant 0 : index
    %6 = vector.load %arg5[%c0_3, %c0_4, %c0_5] : memref<1x1x32xf32, #tpu.memory_space<vmem>>, vector<1x1x32xf32>
    %7 = vector.shape_cast %6 : vector<1x1x32xf32> to vector<1x32xf32>
    %8 = vector.shape_cast %5 : vector<1x32xf32> to vector<1x1x32xf32>
    tpu.vector_store %arg5[%c0_3, %c0_4, %c0_5], %8 {strides = array<i32>} : memref<1x1x32xf32, #tpu.memory_space<vmem>>, vector<1x1x32xf32>,
    %9 = arith.mulf %3, %3 : vector<8x32xf32>
    %cst_6 = arith.constant dense<0.000000e+00> : vector<32xf32>
    %10 = vector.multi_reduction <add>, %9, %cst_6 [0] : vector<8x32xf32> to vector<32xf32>
    %11 = vector.shape_cast %10 : vector<32xf32> to vector<1x32xf32>
    %c0_7 = arith.constant 0 : index
    %c0_8 = arith.constant 0 : index
    %c0_9 = arith.constant 0 : index
    %12 = vector.load %arg6[%c0_7, %c0_8, %c0_9] : memref<1x1x32xf32, #tpu.memory_space<vmem>>, vector<1x1x32xf32>
    %13 = vector.shape_cast %12 : vector<1x1x32xf32> to vector<1x32xf32>
    %14 = vector.shape_cast %11 : vector<1x32xf32> to vector<1x1x32xf32>
    tpu.vector_store %arg6[%c0_7, %c0_8, %c0_9], %14 {strides = array<i32>} : memref<1x1x32xf32, #tpu.memory_space<vmem>>, vector<1x1x32xf32>,
    %c0_10 = arith.constant 0 : index
    %c0_11 = arith.constant 0 : index
    %15 = vector.load %arg2[%c0_10, %c0_11] : memref<8x16xf32, #tpu.memory_space<vmem>>, vector<8x16xf32>
    %c0_12 = arith.constant 0 : index
    %c0_13 = arith.constant 0 : index
    %16 = vector.load %arg4[%c0_12, %c0_13] : memref<1x16xf32, #tpu.memory_space<vmem>>, vector<1x16xf32>
    %17 = vector.broadcast %16 : vector<1x16xf32> to vector<8x16xf32>
    %18 = arith.subf %15, %17 : vector<8x16xf32>
    %cst_14 = arith.constant dense<0.000000e+00> : vector<16xf32>
    %19 = vector.multi_reduction <add>, %18, %cst_14 [0] : vector<8x16xf32> to vector<16xf32>
    %20 = vector.shape_cast %19 : vector<16xf32> to vector<1x16xf32>
    %c0_15 = arith.constant 0 : index
    %c0_16 = arith.constant 0 : index
    %c0_17 = arith.constant 0 : index
    %21 = vector.load %arg7[%c0_15, %c0_16, %c0_17] : memref<1x1x16xf32, #tpu.memory_space<vmem>>, vector<1x1x16xf32>
    %22 = vector.shape_cast %21 : vector<1x1x16xf32> to vector<1x16xf32>
    %23 = vector.shape_cast %20 : vector<1x16xf32> to vector<1x1x16xf32>
    tpu.vector_store %arg7[%c0_15, %c0_16, %c0_17], %23 {strides = array<i32>} : memref<1x1x16xf32, #tpu.memory_space<vmem>>, vector<1x1x16xf32>,
    %24 = arith.mulf %18, %18 : vector<8x16xf32>
    %cst_18 = arith.constant dense<0.000000e+00> : vector<16xf32>
    %25 = vector.multi_reduction <add>, %24, %cst_18 [0] : vector<8x16xf32> to vector<16xf32>
    %26 = vector.shape_cast %25 : vector<16xf32> to vector<1x16xf32>
    %c0_19 = arith.constant 0 : index
    %c0_20 = arith.constant 0 : index
    %c0_21 = arith.constant 0 : index
    %27 = vector.load %arg8[%c0_19, %c0_20, %c0_21] : memref<1x1x16xf32, #tpu.memory_space<vmem>>, vector<1x1x16xf32>
    %28 = vector.shape_cast %27 : vector<1x1x16xf32> to vector<1x16xf32>
    %29 = vector.shape_cast %26 : vector<1x16xf32> to vector<1x1x16xf32>
    tpu.vector_store %arg8[%c0_19, %c0_20, %c0_21], %29 {strides = array<i32>} : memref<1x1x16xf32, #tpu.memory_space<vmem>>, vector<1x1x16xf32>,
    return
  }
  func.func @transform_0(%arg0: i32) -> (i32, i32) {
    %c0_i32 = arith.constant 0 : i32
    %c0_i32_0 = arith.constant 0 : i32
    return %arg0, %c0_i32 : i32, i32
  }
  func.func @transform_1(%arg0: i32) -> (i32, i32) {
    %c0_i32 = arith.constant 0 : i32
    %c0_i32_0 = arith.constant 0 : i32
    return %arg0, %c0_i32 : i32, i32
  }
  func.func @transform_2(%arg0: i32) -> (i32, i32) {
    %c0_i32 = arith.constant 0 : i32
    %c0_i32_0 = arith.constant 0 : i32
    %c0_i32_1 = arith.constant 0 : i32
    return %c0_i32, %c0_i32_0 : i32, i32
  }
  func.func @transform_3(%arg0: i32) -> (i32, i32) {
    %c0_i32 = arith.constant 0 : i32
    %c0_i32_0 = arith.constant 0 : i32
    %c0_i32_1 = arith.constant 0 : i32
    return %c0_i32, %c0_i32_0 : i32, i32
  }
  func.func @transform_4(%arg0: i32) -> (i32, i32, i32) {
    %c0_i32 = arith.constant 0 : i32
    %c0_i32_0 = arith.constant 0 : i32
    %c0_i32_1 = arith.constant 0 : i32
    return %arg0, %c0_i32, %c0_i32_0 : i32, i32, i32
  }
  func.func @transform_5(%arg0: i32) -> (i32, i32, i32) {
    %c0_i32 = arith.constant 0 : i32
    %c0_i32_0 = arith.constant 0 : i32
    %c0_i32_1 = arith.constant 0 : i32
    return %arg0, %c0_i32, %c0_i32_0 : i32, i32, i32
  }
  func.func @transform_6(%arg0: i32) -> (i32, i32, i32) {
    %c0_i32 = arith.constant 0 : i32
    %c0_i32_0 = arith.constant 0 : i32
    %c0_i32_1 = arith.constant 0 : i32
    return %arg0, %c0_i32, %c0_i32_0 : i32, i32, i32
  }
  func.func @transform_7(%arg0: i32) -> (i32, i32, i32) {
    %c0_i32 = arith.constant 0 : i32
    %c0_i32_0 = arith.constant 0 : i32
    %c0_i32_1 = arith.constant 0 : i32
    return %arg0, %c0_i32, %c0_i32_0 : i32, i32, i32
  }
}

</mosaic_0001>

<llo_original>
// kernel: tpu_custom_call.1
$region0: #{tpu_custom_call.1}
  #allocation0 [shape = 'u32[]', space=smem, size = 0x4, offset = 0x4, fixed_abs, tag = 'smem constant byte address 0x4 - core index']
  #allocation1 [shape = 'u32[72,128]{1,0:T(1,128)}', space=vmem, size = 0x9000, scoped, tag = 'internal scratch']
  %s0 = inlined_call_operand.vmem [shape: f32[32,32], index: 0, kind: input, shape index: {}]
  %s1 = inlined_call_operand.vmem [shape: f32[32,16], index: 1, kind: input, shape index: {}]
  %s2 = inlined_call_operand.vmem [shape: f32[1,32], index: 2, kind: input, shape index: {}]
  %s3 = inlined_call_operand.vmem [shape: f32[1,16], index: 3, kind: input, shape index: {}]
  %s4 = inlined_call_operand.hbm [shape: f32[4,1,32], index: 4, kind: output, shape index: {0}]
  %s5 = inlined_call_operand.hbm [shape: f32[4,1,32], index: 5, kind: output, shape index: {1}]
  %s6 = inlined_call_operand.hbm [shape: f32[4,1,16], index: 6, kind: output, shape index: {2}]
  %s7 = inlined_call_operand.hbm [shape: f32[4,1,16], index: 7, kind: output, shape index: {3}]
  %8 = xla_tuple %s4, %s5, %s6, %s7
  %s9 = sld [smem:[#allocation0]]
  $region73: #{tpu_custom_call.1} parent=0
    _
  %s11 = ssub.s32 1, %s9
  %s12 = scalar_select 0, %s11, %s9
  $region1: #{tpu_custom_call.1} parent=0
    #allocation2 [shape = 'u8[1024]{0}', space=vmem, size = 0x400, scoped, tag = 'output window, operand 0']
    #allocation3 [shape = 's32[2]{0}', space=sflag, size = 0x8, scoped, tag = 'scoped memory for tpu_custom_call.1']
    #allocation4 [shape = 'u8[1024]{0}', space=vmem, size = 0x400, scoped, tag = 'output window, operand 1']
    #allocation5 [shape = 's32[2]{0}', space=sflag, size = 0x8, scoped, tag = 'scoped memory for tpu_custom_call.1']
    #allocation6 [shape = 'u8[1024]{0}', space=vmem, size = 0x400, scoped, tag = 'output window, operand 2']
    #allocation7 [shape = 'u8[1024]{0}', space=vmem, size = 0x400, scoped, tag = 'output window, operand 3']
    #allocation8 [shape = 's32[2]{0}', space=sflag, size = 0x8, scoped, tag = 'scoped memory for tpu_custom_call.1']
    %13 = vsyncpa [#allocation3], 0
    %s14 = scalar_lea.sflag [#allocation3], 1
    %15 = vsyncpa %s14, 0
    %16 = vsyncpa [#allocation5], 0
    %s17 = scalar_lea.sflag [#allocation5], 1
    %18 = vsyncpa %s17, 0
    %19 = vsyncpa [#allocation8], 0
    %s20 = scalar_lea.sflag [#allocation8], 1
    %21 = vsyncpa %s20, 0
    loop: start=0, step=1, limit=6
    $region2: #{tpu_custom_call.1} parent=1 // loop_pre_header
      _
    $region3: #{tpu_custom_call.1} parent=1 // loop_header
      %s23 = sphi 0, %s27
      %p24 = scmp.ge.s32.totalorder %s23, 6
      %s33 = sphi 0, %s35
      %s36 = sphi 0, %s33
      %s37 = sphi 0, %s36
      %s53 = sphi 0, %s37
      %s59 = sphi 0, %s61
      %s62 = sphi 0, %s59
      %s63 = sphi 0, %s62
      %s79 = sphi 0, %s63
      %s83 = sphi 0, %s83
      %s85 = sphi 0, %s83
      %s86 = sphi 0, %s85
      %s100 = sphi 0, %s86
      %s104 = sphi 0, %s104
      %s106 = sphi 0, %s104
      %s107 = sphi 0, %s106
      %s121 = sphi 0, %s107
      %s127 = sphi 0, %s129
      %s130 = sphi 0, %s127
      %s131 = sphi 0, %s130
      %s147 = sphi 0, %s131
      %s153 = sphi 0, %s155
      %s156 = sphi 0, %s153
      %s157 = sphi 0, %s156
      %s173 = sphi 0, %s157
      %s179 = sphi 0, %s181
      %s182 = sphi 0, %s179
      %s183 = sphi 0, %s182
      %s199 = sphi 0, %s183
      %s205 = sphi 0, %s207
      %s208 = sphi 0, %s205
      %s209 = sphi 0, %s208
      %s225 = sphi 0, %s209
    $region4: #{tpu_custom_call.1} parent=1 // loop_header_branch
      %26 = sbr.rel (%p24) target = $region8
    $region5: #{tpu_custom_call.1} parent=1 // loop_body
      %s28 = ssub.s32 %s23, 1
      %s29 = ssub.s32 %s23, 2
      %s30 = sadd.s32 %s23, 1
      %s31 = ssub.s32 %s23, %s30
      %p32 = scmp.eq.s32.totalorder %s31, 0
      %s34 = sadd.s32 %s33, 1
      %s35 = scalar_select %p32, %s33, %s34
      %p38 = pneg %p32
      %p39 = scmp.eq.s32.totalorder %s23, 3
      %p40 = por %p38, %p39
      %p41 = scmp.ne.s32.totalorder %s33, %s36
      %p42 = scmp.eq.s32.totalorder %s23, 0
      %p43 = por %p41, %p42
      %p44 = scmp.ne.s32.totalorder %s33, %s36
      %p45 = scmp.eq.s32.totalorder %s28, 3
      %p46 = por %p44, %p45
      %p47 = scmp.ne.s32.totalorder %s36, %s37
      %p48 = scmp.eq.s32.totalorder %s28, 0
      %p49 = por %p47, %p48
      %p50 = scmp.ne.s32.totalorder %s36, %s37
      %p51 = scmp.eq.s32.totalorder %s29, 3
      %p52 = por %p50, %p51
      %p54 = scmp.ne.s32.totalorder %s37, %s53
      %p55 = scmp.eq.s32.totalorder %s29, 0
      %p56 = por %p54, %p55
      %s57 = ssub.s32 %s23, %s30
      %p58 = scmp.eq.s32.totalorder %s57, 0
      %s60 = sadd.s32 %s59, 1
      %s61 = scalar_select %p58, %s59, %s60
      %p64 = pneg %p58
      %p65 = scmp.eq.s32.totalorder %s23, 3
      %p66 = por %p64, %p65
      %p67 = scmp.ne.s32.totalorder %s59, %s62
      %p68 = scmp.eq.s32.totalorder %s23, 0
      %p69 = por %p67, %p68
      %p70 = scmp.ne.s32.totalorder %s59, %s62
      %p71 = scmp.eq.s32.totalorder %s28, 3
      %p72 = por %p70, %p71
      %p73 = scmp.ne.s32.totalorder %s62, %s63
      %p74 = scmp.eq.s32.totalorder %s28, 0
      %p75 = por %p73, %p74
      %p76 = scmp.ne.s32.totalorder %s62, %s63
      %p77 = scmp.eq.s32.totalorder %s29, 3
      %p78 = por %p76, %p77
      %p80 = scmp.ne.s32.totalorder %s63, %s79
      %p81 = scmp.eq.s32.totalorder %s29, 0
      %p82 = por %p80, %p81
      %s84 = sadd.s32 %s83, 1
      %p87 = scmp.eq.s32.totalorder %s23, 3
      %p88 = scmp.ne.s32.totalorder %s83, %s85
      %p89 = scmp.eq.s32.totalorder %s23, 0
      %p90 = por %p88, %p89
      %p91 = scmp.ne.s32.totalorder %s83, %s85
      %p92 = scmp.eq.s32.totalorder %s28, 3
      %p93 = por %p91, %p92
      %p94 = scmp.ne.s32.totalorder %s85, %s86
      %p95 = scmp.eq.s32.totalorder %s28, 0
      %p96 = por %p94, %p95
      %p97 = scmp.ne.s32.totalorder %s85, %s86
      %p98 = scmp.eq.s32.totalorder %s29, 3
      %p99 = por %p97, %p98
      %p101 = scmp.ne.s32.totalorder %s86, %s100
      %p102 = scmp.eq.s32.totalorder %s29, 0
      %p103 = por %p101, %p102
      %s105 = sadd.s32 %s104, 1
      %p108 = scmp.eq.s32.totalorder %s23, 3
      %p109 = scmp.ne.s32.totalorder %s104, %s106
      %p110 = scmp.eq.s32.totalorder %s23, 0
      %p111 = por %p109, %p110
      %p112 = scmp.ne.s32.totalorder %s104, %s106
      %p113 = scmp.eq.s32.totalorder %s28, 3
      %p114 = por %p112, %p113
      %p115 = scmp.ne.s32.totalorder %s106, %s107
      %p116 = scmp.eq.s32.totalorder %s28, 0
      %p117 = por %p115, %p116
      %p118 = scmp.ne.s32.totalorder %s106, %s107
      %p119 = scmp.eq.s32.totalorder %s29, 3
      %p120 = por %p118, %p119
      %p122 = scmp.ne.s32.totalorder %s107, %s121
      %p123 = scmp.eq.s32.totalorder %s29, 0
      %p124 = por %p122, %p123
      %s125 = ssub.s32 %s23, %s30
      %p126 = scmp.eq.s32.totalorder %s125, 0
      %s128 = sadd.s32 %s127, 1
      %s129 = scalar_select %p126, %s127, %s128
      %p132 = pneg %p126
      %p133 = scmp.eq.s32.totalorder %s23, 3
      %p134 = por %p132, %p133
      %p135 = scmp.ne.s32.totalorder %s127, %s130
      %p136 = scmp.eq.s32.totalorder %s23, 0
      %p137 = por %p135, %p136
      %p138 = scmp.ne.s32.totalorder %s127, %s130
      %p139 = scmp.eq.s32.totalorder %s28, 3
      %p140 = por %p138, %p139
      %p141 = scmp.ne.s32.totalorder %s130, %s131
      %p142 = scmp.eq.s32.totalorder %s28, 0
      %p143 = por %p141, %p142
      %p144 = scmp.ne.s32.totalorder %s130, %s131
      %p145 = scmp.eq.s32.totalorder %s29, 3
      %p146 = por %p144, %p145
      %p148 = scmp.ne.s32.totalorder %s131, %s147
      %p149 = scmp.eq.s32.totalorder %s29, 0
      %p150 = por %p148, %p149
      %s151 = ssub.s32 %s23, %s30
      %p152 = scmp.eq.s32.totalorder %s151, 0
      %s154 = sadd.s32 %s153, 1
      %s155 = scalar_select %p152, %s153, %s154
      %p158 = pneg %p152
      %p159 = scmp.eq.s32.totalorder %s23, 3
      %p160 = por %p158, %p159
      %p161 = scmp.ne.s32.totalorder %s153, %s156
      %p162 = scmp.eq.s32.totalorder %s23, 0
      %p163 = por %p161, %p162
      %p164 = scmp.ne.s32.totalorder %s153, %s156
      %p165 = scmp.eq.s32.totalorder %s28, 3
      %p166 = por %p164, %p165
      %p167 = scmp.ne.s32.totalorder %s156, %s157
      %p168 = scmp.eq.s32.totalorder %s28, 0
      %p169 = por %p167, %p168
      %p170 = scmp.ne.s32.totalorder %s156, %s157
      %p171 = scmp.eq.s32.totalorder %s29, 3
      %p172 = por %p170, %p171
      %p174 = scmp.ne.s32.totalorder %s157, %s173
      %p175 = scmp.eq.s32.totalorder %s29, 0
      %p176 = por %p174, %p175
      %s177 = ssub.s32 %s23, %s30
      %p178 = scmp.eq.s32.totalorder %s177, 0
      %s180 = sadd.s32 %s179, 1
      %s181 = scalar_select %p178, %s179, %s180
      %p184 = pneg %p178
      %p185 = scmp.eq.s32.totalorder %s23, 3
      %p186 = por %p184, %p185
      %p187 = scmp.ne.s32.totalorder %s179, %s182
      %p188 = scmp.eq.s32.totalorder %s23, 0
      %p189 = por %p187, %p188
      %p190 = scmp.ne.s32.totalorder %s179, %s182
      %p191 = scmp.eq.s32.totalorder %s28, 3
      %p192 = por %p190, %p191
      %p193 = scmp.ne.s32.totalorder %s182, %s183
      %p194 = scmp.eq.s32.totalorder %s28, 0
      %p195 = por %p193, %p194
      %p196 = scmp.ne.s32.totalorder %s182, %s183
      %p197 = scmp.eq.s32.totalorder %s29, 3
      %p198 = por %p196, %p197
      %p200 = scmp.ne.s32.totalorder %s183, %s199
      %p201 = scmp.eq.s32.totalorder %s29, 0
      %p202 = por %p200, %p201
      %s203 = ssub.s32 %s23, %s30
      %p204 = scmp.eq.s32.totalorder %s203, 0
      %s206 = sadd.s32 %s205, 1
      %s207 = scalar_select %p204, %s205, %s206
      %p210 = pneg %p204
      %p211 = scmp.eq.s32.totalorder %s23, 3
      %p212 = por %p210, %p211
      %p213 = scmp.ne.s32.totalorder %s205, %s208
      %p214 = scmp.eq.s32.totalorder %s23, 0
      %p215 = por %p213, %p214
      %p216 = scmp.ne.s32.totalorder %s205, %s208
      %p217 = scmp.eq.s32.totalorder %s28, 3
      %p218 = por %p216, %p217
      %p219 = scmp.ne.s32.totalorder %s208, %s209
      %p220 = scmp.eq.s32.totalorder %s28, 0
      %p221 = por %p219, %p220
      %p222 = scmp.ne.s32.totalorder %s208, %s209
      %p223 = scmp.eq.s32.totalorder %s29, 3
      %p224 = por %p222, %p223
      %p226 = scmp.ne.s32.totalorder %s209, %s225
      %p227 = scmp.eq.s32.totalorder %s29, 0
      %p228 = por %p226, %p227
      %p229 = scmp.le.s32.totalorder 1, %s23
      %p230 = scmp.lt.s32.totalorder %s23, 5
      %p231 = pnand %p229, %p230
      %p232 = pneg %p231
      // Predicated region
      $region9: #{tpu_custom_call.1} parent=5 // pred_check
        _
      $region10: #{tpu_custom_call.1} parent=5 // pred_check_branch
        %234 = sbr.rel (%p231) target = $region12
      $region11: #{tpu_custom_call.1} parent=5 // pred_region
        %s235 = ssub.s32 %s23, 1
        // Predicated region
        $region13: #{tpu_custom_call.1} parent=11 // pred_check
          %p236 = pneg %p96
        $region14: #{tpu_custom_call.1} parent=11 // pred_check_branch
          %238 = sbr.rel (%p236) target = $region16
        $region15: #{tpu_custom_call.1} parent=11 // pred_region
          _
        $region16: #{tpu_custom_call.1} parent=11 // pred_fallthru
          _
        // Predicated region
        $region17: #{tpu_custom_call.1} parent=11 // pred_check
          %p239 = pneg %p117
        $region18: #{tpu_custom_call.1} parent=11 // pred_check_branch
          %241 = sbr.rel (%p239) target = $region20
        $region19: #{tpu_custom_call.1} parent=11 // pred_region
          _
        $region20: #{tpu_custom_call.1} parent=11 // pred_fallthru
          _
      $region12: #{tpu_custom_call.1} parent=5 // pred_fallthru
        _
      %p242 = scmp.lt.s32.totalorder %s23, 4
      // Predicated region
      $region21: #{tpu_custom_call.1} parent=5 // pred_check
        %p243 = pneg %p242
      $region22: #{tpu_custom_call.1} parent=5 // pred_check_branch
        %245 = sbr.rel (%p243) target = $region24
      $region23: #{tpu_custom_call.1} parent=5 // pred_region
        // Predicated region
        $region25: #{tpu_custom_call.1} parent=23 // pred_check
          %p246 = pneg %p43
        $region26: #{tpu_custom_call.1} parent=23 // pred_check_branch
          %248 = sbr.rel (%p246) target = $region28
        $region27: #{tpu_custom_call.1} parent=23 // pred_region
          %p249 = scmp.lt.s32.totalorder %s23, 3
          %s250 = scalar_select %p249, %s23, 3
          %s251 = smul.addr %s250, 8
          %s252 = scalar_lea.vmem %s0, %s251
        $region28: #{tpu_custom_call.1} parent=23 // pred_fallthru
          _
        // Predicated region
        $region29: #{tpu_custom_call.1} parent=23 // pred_check
          %p253 = pneg %p69
        $region30: #{tpu_custom_call.1} parent=23 // pred_check_branch
          %255 = sbr.rel (%p253) target = $region32
        $region31: #{tpu_custom_call.1} parent=23 // pred_region
          %p256 = scmp.lt.s32.totalorder %s23, 3
          %s257 = scalar_select %p256, %s23, 3
          %s258 = smul.addr %s257, 8
          %s259 = scalar_lea.vmem %s1, %s258
        $region32: #{tpu_custom_call.1} parent=23 // pred_fallthru
          _
      $region24: #{tpu_custom_call.1} parent=5 // pred_fallthru
        _
      %p260 = scmp.le.s32.totalorder 1, %s23
      %p261 = scmp.lt.s32.totalorder %s23, 5
      %p262 = pnand %p260, %p261
      %p263 = pneg %p262
      // Predicated region
      $region33: #{tpu_custom_call.1} parent=5 // pred_check
        _
      $region34: #{tpu_custom_call.1} parent=5 // pred_check_branch
        %265 = sbr.rel (%p262) target = $region36
      $region35: #{tpu_custom_call.1} parent=5 // pred_region
        %s266 = ssub.s32 %s23, 1
        %p267 = scmp.lt.s32.totalorder %s28, 3
        %s268 = scalar_select %p267, %s28, 3
        %s269 = smul.addr %s268, 8
        %s270 = scalar_lea.vmem %s0, %s269
        %p271 = pneg %p49
        %p272 = pneg %p46
        %p273 = scmp.lt.s32.totalorder %s28, 3
        %s274 = scalar_select %p273, %s28, 3
        %s275 = smul.addr %s274, 8
        %s276 = scalar_lea.vmem %s1, %s275
        %p277 = pneg %p75
        %p278 = pneg %p72
        %p279 = pneg %p96
        %p280 = pneg %p93
        %p281 = pneg %p117
        %p282 = pneg %p114
        %p283 = pneg %p143
        %p284 = pneg %p140
        %s285 = sand.u32 %s130, 1
        %s286 = scalar_lea.sflag [#allocation3], %s285
        %s287 = sand.u32 %s130, 1
        %s288 = scalar_lea.vmem [#allocation2], %s287
        %p289 = pneg %p169
        %p290 = pneg %p166
        %s291 = sand.u32 %s28, 1
        %s292 = scalar_lea.sflag [#allocation5], %s291
        %s293 = sand.u32 %s156, 1
        %s294 = scalar_lea.vmem [#allocation4], %s293
        %p295 = pneg %p195
        %p296 = pneg %p192
        %s297 = sand.u32 %s28, 1
        %s298 = scalar_lea.sflag [#allocation5], %s297
        %s299 = sand.u32 %s182, 1
        %s300 = scalar_lea.vmem [#allocation6], %s299
        %p301 = pneg %p221
        %p302 = pneg %p218
        %s303 = sand.u32 %s208, 1
        %s304 = scalar_lea.sflag [#allocation8], %s303
        %s305 = sand.u32 %s208, 1
        %s306 = scalar_lea.vmem [#allocation7], %s305
        %p307 = scmp.lt.s32.totalorder %s28, 3
        %s308 = scalar_select %p307, %s28, 3
        %s309 = smul.addr %s308, 8
        %s310 = scalar_lea.vmem %s0, %s309
        %p311 = scmp.lt.s32.totalorder %s28, 3
        %s312 = scalar_select %p311, %s28, 3
        %s313 = smul.addr %s312, 8
        %s314 = scalar_lea.vmem %s1, %s313
        %v315 = vld [vmem:[%s310] sm:$0xff]
        %v316 = vld [vmem:[%s2] sm:$0x1]
        %v318 = vperm.slane %v316, 0
        %v320 = vsub.f32 %v315, %v318
        %vm321 = vcmask 261120
        %v322 = vsel %vm321, %v320, 0.0
        %v323 = vrot.slane %v322, 4
        %v324 = vadd.f32 %v322, %v323
        %v325 = vrot.slane %v324, 2
        %v326 = vadd.f32 %v324, %v325
        %v327 = vrot.slane %v326, 1
        %v328 = vadd.f32 %v326, %v327
        %vm329 = vcmask 253952
        %330 = vst.msk [vmem:[%s288] sm:$0x1] %vm329, %v328
        %v331 = vmul.f32 %v320, %v320
        %v332 = vsel %vm321, %v331, 0.0
        %v333 = vrot.slane %v332, 4
        %v334 = vadd.f32 %v332, %v333
        %v335 = vrot.slane %v334, 2
        %v336 = vadd.f32 %v334, %v335
        %v337 = vrot.slane %v336, 1
        %v338 = vadd.f32 %v336, %v337
        %339 = vst.msk [vmem:[%s294] sm:$0x1] %vm329, %v338
        %v340 = vld [vmem:[%s314] sm:$0xff]
        %v341 = vld [vmem:[%s3] sm:$0x1]
        %v343 = vperm.slane %v341, 0
        %v345 = vsub.f32 %v340, %v343
        %vm346 = vcmask 130048
        %v347 = vsel %vm346, %v345, 0.0
        %v348 = vrot.slane %v347, 4
        %v349 = vadd.f32 %v347, %v348
        %v350 = vrot.slane %v349, 2
        %v351 = vadd.f32 %v349, %v350
        %v352 = vrot.slane %v351, 1
        %v353 = vadd.f32 %v351, %v352
        %vm354 = vcmask 122880
        %355 = vst.msk [vmem:[%s300] sm:$0x1] %vm354, %v353
        %v356 = vmul.f32 %v345, %v345
        %v357 = vsel %vm346, %v356, 0.0
        %v358 = vrot.slane %v357, 4
        %v359 = vadd.f32 %v357, %v358
        %v360 = vrot.slane %v359, 2
        %v361 = vadd.f32 %v359, %v360
        %v362 = vrot.slane %v361, 1
        %v363 = vadd.f32 %v361, %v362
        %364 = vst.msk [vmem:[%s306] sm:$0x1] %vm354, %v363
        %s365 = sand.u32 %s130, 1
        %s366 = scalar_lea.sflag [#allocation3], %s365
        %s367 = sand.u32 %s130, 1
        %s368 = scalar_lea.vmem [#allocation2], %s367
        %s369 = sand.u32 %s28, 1
        %s370 = scalar_lea.sflag [#allocation5], %s369
        %s371 = sand.u32 %s156, 1
        %s372 = scalar_lea.vmem [#allocation4], %s371
        %s373 = sand.u32 %s28, 1
        %s374 = scalar_lea.sflag [#allocation5], %s373
        %s375 = sand.u32 %s182, 1
        %s376 = scalar_lea.vmem [#allocation6], %s375
        %s377 = sand.u32 %s208, 1
        %s378 = scalar_lea.sflag [#allocation8], %s377
        %s379 = sand.u32 %s208, 1
        %s380 = scalar_lea.vmem [#allocation7], %s379
        // Predicated region
        $region37: #{tpu_custom_call.1} parent=35 // pred_check
          %p381 = pneg %p140
        $region38: #{tpu_custom_call.1} parent=35 // pred_check_branch
          %383 = sbr.rel (%p381) target = $region40
        $region39: #{tpu_custom_call.1} parent=35 // pred_region
          %385 = vsyncadd %s366, 0
          %s386 = scalar_lea.hbm %s4, %s28
          %s388 = sshll.u32 %s368, 4
          %s389 = int_to_ptr.vmem [resolvable:$true] %s388
          %s390 = sshll.u32 %s386, 4
          %s391 = int_to_ptr.hbm [resolvable:$true] %s390
          %393 = dma.vmem_to_hbm [thread:$0]  %s389, 16, %s391, %s366
        $region40: #{tpu_custom_call.1} parent=35 // pred_fallthru
          _
        // Predicated region
        $region41: #{tpu_custom_call.1} parent=35 // pred_check
          %p394 = pneg %p166
        $region42: #{tpu_custom_call.1} parent=35 // pred_check_branch
          %396 = sbr.rel (%p394) target = $region44
        $region43: #{tpu_custom_call.1} parent=35 // pred_region
          %398 = vsyncadd %s370, 0
          %s399 = scalar_lea.hbm %s5, %s28
          %s401 = sshll.u32 %s372, 4
          %s402 = int_to_ptr.vmem [resolvable:$true] %s401
          %s403 = sshll.u32 %s399, 4
          %s404 = int_to_ptr.hbm [resolvable:$true] %s403
          %406 = dma.vmem_to_hbm [thread:$0]  %s402, 16, %s404, %s370
        $region44: #{tpu_custom_call.1} parent=35 // pred_fallthru
          _
        // Predicated region
        $region45: #{tpu_custom_call.1} parent=35 // pred_check
          %p407 = pneg %p192
        $region46: #{tpu_custom_call.1} parent=35 // pred_check_branch
          %409 = sbr.rel (%p407) target = $region48
        $region47: #{tpu_custom_call.1} parent=35 // pred_region
          %411 = vsyncadd %s374, 0
          %s412 = scalar_lea.hbm %s6, %s28
          %s414 = sshll.u32 %s376, 4
          %s415 = int_to_ptr.vmem [resolvable:$true] %s414
          %s416 = sshll.u32 %s412, 4
          %s417 = int_to_ptr.hbm [resolvable:$true] %s416
          %419 = dma.vmem_to_hbm [thread:$0]  %s415, 16, %s417, %s374
        $region48: #{tpu_custom_call.1} parent=35 // pred_fallthru
          _
        // Predicated region
        $region49: #{tpu_custom_call.1} parent=35 // pred_check
          %p420 = pneg %p218
        $region50: #{tpu_custom_call.1} parent=35 // pred_check_branch
          %422 = sbr.rel (%p420) target = $region52
        $region51: #{tpu_custom_call.1} parent=35 // pred_region
          %424 = vsyncadd %s378, 0
          %s425 = scalar_lea.hbm %s7, %s28
          %s427 = sshll.u32 %s380, 4
          %s428 = int_to_ptr.vmem [resolvable:$true] %s427
          %s429 = sshll.u32 %s425, 4
          %s430 = int_to_ptr.hbm [resolvable:$true] %s429
          %432 = dma.vmem_to_hbm [thread:$0]  %s428, 16, %s430, %s378
        $region52: #{tpu_custom_call.1} parent=35 // pred_fallthru
          _
      $region36: #{tpu_custom_call.1} parent=5 // pred_fallthru
        _
      %p433 = scmp.le.s32.totalorder 2, %s23
      // Predicated region
      $region53: #{tpu_custom_call.1} parent=5 // pred_check
        %p434 = pneg %p433
      $region54: #{tpu_custom_call.1} parent=5 // pred_check_branch
        %436 = sbr.rel (%p434) target = $region56
      $region55: #{tpu_custom_call.1} parent=5 // pred_region
        %s437 = ssub.s32 %s23, 2
        // Predicated region
        $region57: #{tpu_custom_call.1} parent=55 // pred_check
          %p438 = pneg %p146
        $region58: #{tpu_custom_call.1} parent=55 // pred_check_branch
          %440 = sbr.rel (%p438) target = $region60
        $region59: #{tpu_custom_call.1} parent=55 // pred_region
          %s441 = sand.u32 %s131, 1
          %s442 = scalar_lea.sflag [#allocation3], %s441
          %s443 = sand.u32 %s131, 1
          %s444 = scalar_lea.vmem [#allocation2], %s443
          %446 = dma.done %s442, 16
        $region60: #{tpu_custom_call.1} parent=55 // pred_fallthru
          _
        // Predicated region
        $region61: #{tpu_custom_call.1} parent=55 // pred_check
          %p447 = pneg %p172
        $region62: #{tpu_custom_call.1} parent=55 // pred_check_branch
          %449 = sbr.rel (%p447) target = $region64
        $region63: #{tpu_custom_call.1} parent=55 // pred_region
          %s450 = sand.u32 %s29, 1
          %s451 = scalar_lea.sflag [#allocation5], %s450
          %s452 = sand.u32 %s157, 1
          %s453 = scalar_lea.vmem [#allocation4], %s452
          %455 = dma.done %s451, 16
        $region64: #{tpu_custom_call.1} parent=55 // pred_fallthru
          _
        // Predicated region
        $region65: #{tpu_custom_call.1} parent=55 // pred_check
          %p456 = pneg %p198
        $region66: #{tpu_custom_call.1} parent=55 // pred_check_branch
          %458 = sbr.rel (%p456) target = $region68
        $region67: #{tpu_custom_call.1} parent=55 // pred_region
          %s459 = sand.u32 %s29, 1
          %s460 = scalar_lea.sflag [#allocation5], %s459
          %s461 = sand.u32 %s183, 1
          %s462 = scalar_lea.vmem [#allocation6], %s461
          %464 = dma.done %s460, 16
        $region68: #{tpu_custom_call.1} parent=55 // pred_fallthru
          _
        // Predicated region
        $region69: #{tpu_custom_call.1} parent=55 // pred_check
          %p465 = pneg %p224
        $region70: #{tpu_custom_call.1} parent=55 // pred_check_branch
          %467 = sbr.rel (%p465) target = $region72
        $region71: #{tpu_custom_call.1} parent=55 // pred_region
          %s468 = sand.u32 %s209, 1
          %s469 = scalar_lea.sflag [#allocation8], %s468
          %s470 = sand.u32 %s209, 1
          %s471 = scalar_lea.vmem [#allocation7], %s470
          %473 = dma.done %s469, 16
        $region72: #{tpu_custom_call.1} parent=55 // pred_fallthru
          _
      $region56: #{tpu_custom_call.1} parent=5 // pred_fallthru
        _
    $region6: #{tpu_custom_call.1} parent=1 // loop_footer
      %s27 = sadd.s32 1, %s23
    $region7: #{tpu_custom_call.1} parent=1 // loop_footer_branch
      %22 = sbr.rel target = $region3
    $region8: #{tpu_custom_call.1} parent=1 // loop_exit
      _
    %474 = vsyncpa [#allocation3], 1
    %s475 = scalar_lea.sflag [#allocation3], 1
    %476 = vsyncpa %s475, 1
    %477 = vsyncpa [#allocation5], 1
    %s478 = scalar_lea.sflag [#allocation5], 1
    %479 = vsyncpa %s478, 1
    %480 = vsyncpa [#allocation8], 1
    %s481 = scalar_lea.sflag [#allocation8], 1
    %482 = vsyncpa %s481, 1

</llo_original>
